<compile_context>
chip_gen: v7x
topology: tpu7x:2x2x1
jax: 0.10.0
libtpu: 0.0.40
codegen_flags: <defaults>
</compile_context>

<pallas_src>
import functools

import jax
import jax.numpy as jnp
from jax import lax
from jax.experimental import pallas as pl
from jax.experimental.pallas import tpu as pltpu


def _make_msfa_fused_kernel(K, H, W, N, C, eps):
    """Depthwise KxK 'same' conv + training-mode BatchNorm2d, fully fused."""
    p = K // 2
    HW = H * W
    inv_cnt = 1.0 / float(N * HW)

    def kernel(x_ref, mw_ref, gamma_ref, beta_ref, o_ref):
        # x_ref     : (N*C, HW)       images packed along sublanes, spatial on lanes
        # mw_ref    : (K*K, N*C, HW)  per-tap (border-mask * channel-weight)
        # gamma_ref : (N*C, 1)        BN gamma, tiled over the batch rows
        # beta_ref  : (N*C, 1)        BN beta,  tiled over the batch rows
        # o_ref     : (N*C, HW)       final normalized output
        x = x_ref[...]

        # ---- depthwise conv: K*K static taps as lane rolls + pre-masked weights ----
        acc = None
        for kh in range(K):
            for kw in range(K):
                t = kh * K + kw
                off = (kh - p) * W + (kw - p)          # flat spatial offset of the tap
                shift = (-off) % HW                    # y[f] reads x[f + off]
                src = pltpu.roll(x, shift=shift, axis=1) if shift else x
                term = src * mw_ref[t]                 # 1 vmul/tap (mask pre-folded)
                acc = term if acc is None else acc + term

        # ---- BN batch statistics (per channel over N*H*W), all resident in VMEM ----
        # Fold over the N images: rolling the (N*C, 1) row-stats by multiples of C
        # cyclically permutes the image index, so the sum both reduces over the
        # batch AND broadcasts each channel total back to every row.
        def batch_fold(v):
            t = v
            for n in range(1, N):
                t = t + pltpu.roll(v, shift=n * C, axis=0)
            return t

        row_sum = jnp.sum(acc, axis=1, keepdims=True)                # (N*C, 1)
        mean = batch_fold(row_sum) * inv_cnt                         # per-channel mean
        centered = acc - mean                                        # two-pass variance
        row_ssq = jnp.sum(centered * centered, axis=1, keepdims=True)
        var = batch_fold(row_ssq) * inv_cnt                          # biased (training fwd)
        inv_std = lax.rsqrt(var + eps)                               # EUP slot
        scale = gamma_ref[...] * inv_std                             # (N*C, 1)

        o_ref[...] = centered * scale + beta_ref[...]

    return kernel


@functools.partial(jax.jit, static_argnames=("kernel", "eps"))
def _msfa_extract(x_nchw, conv_w, gamma, beta, *, kernel, eps):
    N, C, H, W = x_nchw.shape
    K = kernel
    assert K % 2 == 1, "MSFA_Block assumes an odd kernel (same padding)."
    p = K // 2
    HW = H * W
    NC = N * C

    # ---- static prep (tiny, constant-folded by XLA; no pad of the activation) ----
    x_flat = x_nchw.reshape(NC, HW).astype(jnp.float32)

    hh = jnp.arange(H)[:, None]
    ww = jnp.arange(W)[None, :]
    masks = []
    for kh in range(K):
        for kw in range(K):
            dh, dw = kh - p, kw - p
            valid = ((hh + dh >= 0) & (hh + dh < H) &
                     (ww + dw >= 0) & (ww + dw < W))
            masks.append(valid.reshape(HW))
    mask_arr = jnp.stack(masks, 0).astype(jnp.float32)          # (K*K, HW)
    w_t = conv_w.reshape(C, K * K).astype(jnp.float32).T        # (K*K, C)
    mw_c = w_t[:, :, None] * mask_arr[:, None, :]               # (K*K, C, HW)
    mw = jnp.broadcast_to(mw_c[:, None, :, :],
                          (K * K, N, C, HW)).reshape(K * K, NC, HW)

    gamma_row = jnp.tile(gamma.astype(jnp.float32), N).reshape(NC, 1)
    beta_row = jnp.tile(beta.astype(jnp.float32), N).reshape(NC, 1)

    # ---- single fused kernel: conv + BN stats + affine, one HBM pass ----
    # TODO(synk): for large N or large H*W, add a batch-chunk grid axis (8//C
    # images per step, per-step partial sums marked "parallel" for v7x's 2 TCs)
    # and tile the flat spatial axis in 128-lane multiples with explicit halo
    # rows; the full-row roll+mask trick is only valid when a whole image row
    # range lives in one block.
    kernel_fn = _make_msfa_fused_kernel(K, H, W, N, C, eps)
    out_flat = pl.pallas_call(
        kernel_fn,
        out_shape=jax.ShapeDtypeStruct((NC, HW), jnp.float32),
        in_specs=[
            pl.BlockSpec(memory_space=pltpu.MemorySpace.VMEM),
            pl.BlockSpec(memory_space=pltpu.MemorySpace.VMEM),
            pl.BlockSpec(memory_space=pltpu.MemorySpace.VMEM),
            pl.BlockSpec(memory_space=pltpu.MemorySpace.VMEM),
        ],
        out_specs=pl.BlockSpec(memory_space=pltpu.MemorySpace.VMEM),
        compiler_params=pltpu.CompilerParams(
            vmem_limit_bytes=32 * 1024 * 1024,
        ),
    )(x_flat, mw, gamma_row, beta_row)

    return out_flat.reshape(N, C, H, W)


def msfa_block_forward(x_nchw, conv_w, conv_b, gamma, beta, *,
                       kernel, eps=1e-5, sample1=None, sample2=None):
    """Forward pass of MSFA_Block (NCHW in / NCHW out).

    conv_b is accepted for API parity with nn.Conv2d but is not applied: a
    per-channel constant added right before training-mode BatchNorm is
    cancelled exactly by the batch-mean subtraction, so the returned tensor
    is mathematically identical.
    """
    # TODO(synk): BatchNorm running_mean/running_var tracking (a training-time
    # side effect, not part of the forward output) is not implemented.
    del conv_b
    if sample1 is not None:
        x_nchw = sample1(x_nchw)
    out = _msfa_extract(x_nchw, conv_w, gamma, beta, kernel=kernel, eps=eps)
    if sample2 is not None:
        out = sample2(out)
    return out


def msfa_block_reference(x, conv_w, conv_b, gamma, beta, kernel, eps=1e-5):
    """Pure-JAX reference (NCHW, mirrors PyTorch depthwise conv + BN training fwd)."""
    N, C, H, W = x.shape
    K = kernel
    w = conv_w.reshape(C, 1, K, K)
    y = lax.conv_general_dilated(
        x, w, window_strides=(1, 1),
        padding=[(K // 2, K // 2), (K // 2, K // 2)],
        dimension_numbers=("NCHW", "OIHW", "NCHW"),
        feature_group_count=C)
    y = y + conv_b.reshape(1, C, 1, 1)
    mean = jnp.mean(y, axis=(0, 2, 3), keepdims=True)
    var = jnp.mean((y - mean) ** 2, axis=(0, 2, 3), keepdims=True)
    return ((y - mean) / jnp.sqrt(var + eps)) * gamma.reshape(1, C, 1, 1) \
        + beta.reshape(1, C, 1, 1)


if __name__ == "__main__":
    # Small config consistent with MSFA_Block(in_channels=4, kernel=3)
    N, C, H, W = 2, 4, 16, 16
    K = 3

    key = jax.random.PRNGKey(0)
    kx, kw, kb, kg, kbe = jax.random.split(key, 5)
    x = jax.random.normal(kx, (N, C, H, W), dtype=jnp.float32)
    conv_w = jax.random.normal(kw, (C, K, K), dtype=jnp.float32) * 0.2
    conv_b = jax.random.normal(kb, (C,), dtype=jnp.float32) * 0.1
    gamma = 1.0 + 0.1 * jax.random.normal(kg, (C,), dtype=jnp.float32)
    beta = 0.1 * jax.random.normal(kbe, (C,), dtype=jnp.float32)

    # sample1/sample2 are None in this configuration (identity pass-through).
    out = msfa_block_forward(x, conv_w, conv_b, gamma, beta, kernel=K)
    out = jax.block_until_ready(out)

    ref = msfa_block_reference(x, conv_w, conv_b, gamma, beta, kernel=K)
    assert out.shape == (N, C, H, W)
    max_diff = jnp.max(jnp.abs(out - ref))
    assert jnp.allclose(out, ref, atol=1e-4, rtol=1e-4), \
        f"max abs diff = {max_diff}"

    print("KERNEL_OK")
</pallas_src>

<mosaic_0001>
module attributes {stable_mosaic.version = 11 : i64} {
  func.func @kernel(%arg0: memref<8x256xf32, #tpu.memory_space<vmem>>, %arg1: memref<9x8x256xf32, #tpu.memory_space<vmem>>, %arg2: memref<8x1xf32, #tpu.memory_space<vmem>>, %arg3: memref<8x1xf32, #tpu.memory_space<vmem>>, %arg4: memref<8x256xf32, #tpu.memory_space<vmem>>) attributes {dimension_semantics = [], scalar_prefetch = 0 : i64, scratch_operands = 0 : i64, tpu.core_type = #tpu.core_type<tc>} {
    %c0 = arith.constant 0 : index
    %c0_0 = arith.constant 0 : index
    %0 = vector.load %arg0[%c0, %c0_0] : memref<8x256xf32, #tpu.memory_space<vmem>>, vector<8x256xf32>
    %c17_i32 = arith.constant 17 : i32
    %1 = tpu.dynamic_rotate %0 by %c17_i32 dim 1 : vector<8x256xf32>, i32 -> vector<8x256xf32>
    %c0_1 = arith.constant 0 : index
    %c0_2 = arith.constant 0 : index
    %c0_3 = arith.constant 0 : index
    %2 = vector.load %arg1[%c0_1, %c0_2, %c0_3] : memref<9x8x256xf32, #tpu.memory_space<vmem>>, vector<1x8x256xf32>
    %3 = vector.shape_cast %2 : vector<1x8x256xf32> to vector<8x256xf32>
    %4 = arith.mulf %1, %3 : vector<8x256xf32>
    %c16_i32 = arith.constant 16 : i32
    %5 = tpu.dynamic_rotate %0 by %c16_i32 dim 1 : vector<8x256xf32>, i32 -> vector<8x256xf32>
    %c1 = arith.constant 1 : index
    %c0_4 = arith.constant 0 : index
    %c0_5 = arith.constant 0 : index
    %6 = vector.load %arg1[%c1, %c0_4, %c0_5] : memref<9x8x256xf32, #tpu.memory_space<vmem>>, vector<1x8x256xf32>
    %7 = vector.shape_cast %6 : vector<1x8x256xf32> to vector<8x256xf32>
    %8 = arith.mulf %5, %7 : vector<8x256xf32>
    %9 = arith.addf %4, %8 : vector<8x256xf32>
    %c15_i32 = arith.constant 15 : i32
    %10 = tpu.dynamic_rotate %0 by %c15_i32 dim 1 : vector<8x256xf32>, i32 -> vector<8x256xf32>
    %c2 = arith.constant 2 : index
    %c0_6 = arith.constant 0 : index
    %c0_7 = arith.constant 0 : index
    %11 = vector.load %arg1[%c2, %c0_6, %c0_7] : memref<9x8x256xf32, #tpu.memory_space<vmem>>, vector<1x8x256xf32>
    %12 = vector.shape_cast %11 : vector<1x8x256xf32> to vector<8x256xf32>
    %13 = arith.mulf %10, %12 : vector<8x256xf32>
    %14 = arith.addf %9, %13 : vector<8x256xf32>
    %c1_i32 = arith.constant 1 : i32
    %15 = tpu.dynamic_rotate %0 by %c1_i32 dim 1 : vector<8x256xf32>, i32 -> vector<8x256xf32>
    %c3 = arith.constant 3 : index
    %c0_8 = arith.constant 0 : index
    %c0_9 = arith.constant 0 : index
    %16 = vector.load %arg1[%c3, %c0_8, %c0_9] : memref<9x8x256xf32, #tpu.memory_space<vmem>>, vector<1x8x256xf32>
    %17 = vector.shape_cast %16 : vector<1x8x256xf32> to vector<8x256xf32>
    %18 = arith.mulf %15, %17 : vector<8x256xf32>
    %19 = arith.addf %14, %18 : vector<8x256xf32>
    %c4 = arith.constant 4 : index
    %c0_10 = arith.constant 0 : index
    %c0_11 = arith.constant 0 : index
    %20 = vector.load %arg1[%c4, %c0_10, %c0_11] : memref<9x8x256xf32, #tpu.memory_space<vmem>>, vector<1x8x256xf32>
    %21 = vector.shape_cast %20 : vector<1x8x256xf32> to vector<8x256xf32>
    %22 = arith.mulf %0, %21 : vector<8x256xf32>
    %23 = arith.addf %19, %22 : vector<8x256xf32>
    %c255_i32 = arith.constant 255 : i32
    %24 = tpu.dynamic_rotate %0 by %c255_i32 dim 1 : vector<8x256xf32>, i32 -> vector<8x256xf32>
    %c5 = arith.constant 5 : index
    %c0_12 = arith.constant 0 : index
    %c0_13 = arith.constant 0 : index
    %25 = vector.load %arg1[%c5, %c0_12, %c0_13] : memref<9x8x256xf32, #tpu.memory_space<vmem>>, vector<1x8x256xf32>
    %26 = vector.shape_cast %25 : vector<1x8x256xf32> to vector<8x256xf32>
    %27 = arith.mulf %24, %26 : vector<8x256xf32>
    %28 = arith.addf %23, %27 : vector<8x256xf32>
    %c241_i32 = arith.constant 241 : i32
    %29 = tpu.dynamic_rotate %0 by %c241_i32 dim 1 : vector<8x256xf32>, i32 -> vector<8x256xf32>
    %c6 = arith.constant 6 : index
    %c0_14 = arith.constant 0 : index
    %c0_15 = arith.constant 0 : index
    %30 = vector.load %arg1[%c6, %c0_14, %c0_15] : memref<9x8x256xf32, #tpu.memory_space<vmem>>, vector<1x8x256xf32>
    %31 = vector.shape_cast %30 : vector<1x8x256xf32> to vector<8x256xf32>
    %32 = arith.mulf %29, %31 : vector<8x256xf32>
    %33 = arith.addf %28, %32 : vector<8x256xf32>
    %c240_i32 = arith.constant 240 : i32
    %34 = tpu.dynamic_rotate %0 by %c240_i32 dim 1 : vector<8x256xf32>, i32 -> vector<8x256xf32>
    %c7 = arith.constant 7 : index
    %c0_16 = arith.constant 0 : index
    %c0_17 = arith.constant 0 : index
    %35 = vector.load %arg1[%c7, %c0_16, %c0_17] : memref<9x8x256xf32, #tpu.memory_space<vmem>>, vector<1x8x256xf32>
    %36 = vector.shape_cast %35 : vector<1x8x256xf32> to vector<8x256xf32>
    %37 = arith.mulf %34, %36 : vector<8x256xf32>
    %38 = arith.addf %33, %37 : vector<8x256xf32>
    %c239_i32 = arith.constant 239 : i32
    %39 = tpu.dynamic_rotate %0 by %c239_i32 dim 1 : vector<8x256xf32>, i32 -> vector<8x256xf32>
    %c8 = arith.constant 8 : index
    %c0_18 = arith.constant 0 : index
    %c0_19 = arith.constant 0 : index
    %40 = vector.load %arg1[%c8, %c0_18, %c0_19] : memref<9x8x256xf32, #tpu.memory_space<vmem>>, vector<1x8x256xf32>
    %41 = vector.shape_cast %40 : vector<1x8x256xf32> to vector<8x256xf32>
    %42 = arith.mulf %39, %41 : vector<8x256xf32>
    %43 = arith.addf %38, %42 : vector<8x256xf32>
    %cst = arith.constant dense<0.000000e+00> : vector<8xf32>
    %44 = vector.multi_reduction <add>, %43, %cst [1] : vector<8x256xf32> to vector<8xf32>
    %45 = vector.shape_cast %44 : vector<8xf32> to vector<8x1xf32>
    %c4_i32 = arith.constant 4 : i32
    %46 = tpu.dynamic_rotate %45 by %c4_i32 dim 0 : vector<8x1xf32>, i32 -> vector<8x1xf32>
    %47 = arith.addf %45, %46 : vector<8x1xf32>
    %cst_20 = arith.constant 0.001953125 : f32
    %48 = vector.broadcast %cst_20 : f32 to vector<8x1xf32>
    %49 = arith.mulf %47, %48 : vector<8x1xf32>
    %50 = vector.broadcast %49 : vector<8x1xf32> to vector<8x256xf32>
    %51 = arith.subf %43, %50 : vector<8x256xf32>
    %52 = arith.mulf %51, %51 : vector<8x256xf32>
    %cst_21 = arith.constant dense<0.000000e+00> : vector<8xf32>
    %53 = vector.multi_reduction <add>, %52, %cst_21 [1] : vector<8x256xf32> to vector<8xf32>
    %54 = vector.shape_cast %53 : vector<8xf32> to vector<8x1xf32>
    %c4_i32_22 = arith.constant 4 : i32
    %55 = tpu.dynamic_rotate %54 by %c4_i32_22 dim 0 : vector<8x1xf32>, i32 -> vector<8x1xf32>
    %56 = arith.addf %54, %55 : vector<8x1xf32>
    %cst_23 = arith.constant 0.001953125 : f32
    %57 = vector.broadcast %cst_23 : f32 to vector<8x1xf32>
    %58 = arith.mulf %56, %57 : vector<8x1xf32>
    %cst_24 = arith.constant 9.99999974E-6 : f32
    %59 = vector.broadcast %cst_24 : f32 to vector<8x1xf32>
    %60 = arith.addf %58, %59 : vector<8x1xf32>
    %61 = math.rsqrt %60 : vector<8x1xf32>
    %c0_25 = arith.constant 0 : index
    %c0_26 = arith.constant 0 : index
    %62 = vector.load %arg2[%c0_25, %c0_26] : memref<8x1xf32, #tpu.memory_space<vmem>>, vector<8x1xf32>
    %63 = arith.mulf %62, %61 : vector<8x1xf32>
    %64 = vector.broadcast %63 : vector<8x1xf32> to vector<8x256xf32>
    %65 = arith.mulf %51, %64 : vector<8x256xf32>
    %c0_27 = arith.constant 0 : index
    %c0_28 = arith.constant 0 : index
    %66 = vector.load %arg3[%c0_27, %c0_28] : memref<8x1xf32, #tpu.memory_space<vmem>>, vector<8x1xf32>
    %67 = vector.broadcast %66 : vector<8x1xf32> to vector<8x256xf32>
    %68 = arith.addf %65, %67 : vector<8x256xf32>
    %c0_29 = arith.constant 0 : index
    %c0_30 = arith.constant 0 : index
    %69 = vector.load %arg4[%c0_29, %c0_30] : memref<8x256xf32, #tpu.memory_space<vmem>>, vector<8x256xf32>
    tpu.vector_store %arg4[%c0_29, %c0_30], %68 {strides = array<i32>} : memref<8x256xf32, #tpu.memory_space<vmem>>, vector<8x256xf32>,
    return
  }
}

</mosaic_0001>

<llo_original>
// kernel: tile.13
$region0: #{tile.13}
  #allocation0 [shape = 's32[1]{0}', space=sflag, size = 0x4, scoped, tag = 'scoped memory for tile.13']
  %s0 = inlined_call_operand.vmem [shape: f32[4], index: 0, kind: input, shape index: {}]
  %s1 = inlined_call_operand.vmem [shape: f32[2,4], index: 1, kind: output, shape index: {}]
  // Predicated region
  $region2: #{tile.13} parent=0 // pred_check
    _
  $region3: #{tile.13} parent=0 // pred_check_branch
    %3 = sbr.rel (0) target = $region5
  $region4: #{tile.13} parent=0 // pred_region
    _
  $region5: #{tile.13} parent=0 // pred_fallthru
    _
  %v4 = vld [vmem:[%s0] ss:$0 sm:$0xff]
  %5 = vst [vmem:[%s1] sm:$0x3] %v4

// kernel: tile.0
$region0: #{tile.0}
  %s0 = inlined_call_operand.vmem [shape: f32[2,4], index: 0, kind: input, shape index: {}]
  %s1 = inlined_call_operand.vmem [shape: f32[8,1], index: 1, kind: output, shape index: {}]
  $region1: #{tile.0} parent=0
    #allocation0 [shape = 'u8[4096]{0}', space=vmem, size = 0x1000, scoped, tag = 'scoped mem for input reshape']
    %s3 = sshllo.u32 0, 2
    %v4 = vld [vmem:[%s0] sm:%s3]
    %5 = vst [vmem:[#allocation0] sm:%s3] %v4
    %v6 = vld [vmem:[#allocation0] sm:$0x3]
    %vm7 = vcmask 7168
    %8 = vst.msk [vmem:[%s1] ss:$4 sm:$0x3] %vm7, %v6
    %v9 = vld [vmem:[#allocation0] sm:$0x3]
    %10 = vrot.lane.b32.xlu0 %v9, 127
    %v11 = vpop.permute.xlu0 %10
    %vm12 = vcmask 7168
    %s13 = scalar_lea.vmem %s1, 1
    %14 = vst.msk [vmem:[%s13] ss:$4 sm:$0x3] %vm12, %v11
    %v15 = vld [vmem:[#allocation0] sm:$0x3]
    %16 = vrot.lane.b32.xlu0 %v15, 126
    %v17 = vpop.permute.xlu0 %16
    %vm18 = vcmask 7168
    %s19 = scalar_lea.vmem %s1, 2
    %20 = vst.msk [vmem:[%s19] ss:$4 sm:$0x3] %vm18, %v17
    %v21 = vld [vmem:[#allocation0] sm:$0x3]
    %22 = vrot.lane.b32.xlu0 %v21, 125
    %v23 = vpop.permute.xlu0 %22
    %vm24 = vcmask 7168
    %s25 = scalar_lea.vmem %s1, 3
    %26 = vst.msk [vmem:[%s25] ss:$4 sm:$0x3] %vm24, %v23

// kernel: _msfa_extract.1
$region0: #{_msfa_extract.1}
  #allocation0 [shape = 'u32[]', space=smem, size = 0x4, offset = 0x4, fixed_abs, tag = 'smem constant byte address 0x4 - core index']
  #allocation1 [shape = 'u32[144,128]{1,0:T(1,128)}', space=vmem, size = 0x12000, scoped, tag = 'internal scratch']
  %s0 = inlined_call_operand.vmem [shape: f32[8,256], index: 0, kind: input, shape index: {}]
  %s1 = inlined_call_operand.vmem [shape: f32[9,8,256], index: 1, kind: input, shape index: {}]
  %s2 = inlined_call_operand.vmem [shape: f32[8,1], index: 2, kind: input, shape index: {}]
  %s3 = inlined_call_operand.vmem [shape: f32[8,1], index: 3, kind: input, shape index: {}]
  %s4 = inlined_call_operand.vmem [shape: f32[8,256], index: 4, kind: output, shape index: {}]
  %s5 = sld [smem:[#allocation0]]
  $region26: #{_msfa_extract.1} parent=0
    _
  %s7 = ssub.s32 1, %s5
  %s8 = scalar_select 0, %s7, %s5
  // Predicated region
  $region2: #{_msfa_extract.1} parent=0 // pred_check
    _
  $region3: #{_msfa_extract.1} parent=0 // pred_check_branch
    %10 = sbr.rel (0) target = $region5
  $region4: #{_msfa_extract.1} parent=0 // pred_region
    _
  $region5: #{_msfa_extract.1} parent=0 // pred_fallthru
    _
  // Predicated region
  $region6: #{_msfa_extract.1} parent=0 // pred_check
    _
  $region7: #{_msfa_extract.1} parent=0 // pred_check_branch
    %12 = sbr.rel (0) target = $region9
  $region8: #{_msfa_extract.1} parent=0 // pred_region
    _
  $region9: #{_msfa_extract.1} parent=0 // pred_fallthru
    _
  // Predicated region
  $region10: #{_msfa_extract.1} parent=0 // pred_check
    _
  $region11: #{_msfa_extract.1} parent=0 // pred_check_branch
    %14 = sbr.rel (0) target = $region13
  $region12: #{_msfa_extract.1} parent=0 // pred_region
    _
  $region13: #{_msfa_extract.1} parent=0 // pred_fallthru
    _
  // Predicated region
  $region14: #{_msfa_extract.1} parent=0 // pred_check
    _
  $region15: #{_msfa_extract.1} parent=0 // pred_check_branch
    %16 = sbr.rel (0) target = $region17
  $region16: #{_msfa_extract.1} parent=0 // pred_region
    _
  $region17: #{_msfa_extract.1} parent=0 // pred_fallthru
    _
  %v17 = vld [vmem:[%s0] sm:$0xff]
  %v18 = vld [vmem:[%s0 + $0x8] sm:$0xff]
  %19 = vrot.lane.b32.xlu0 %v17, 17
  %v20 = vpop.permute.xlu0 %19
  %21 = vrot.lane.b32.xlu0 %v18, 17
  %v22 = vpop.permute.xlu0 %21
  %v23 = vlaneseq
  %v24 = vand.u32 %v23, 127
  %vm25 = vcmp.lt.s32.totalorder %v24, 17
  %v26 = vsel %vm25, %v20, %v22
  %v27 = vsel %vm25, %v22, %v20
  %v28 = vld [vmem:[%s1] sm:$0xff]
  %v29 = vld [vmem:[%s1 + $0x8] sm:$0xff]
  %v30 = vmul.f32 %v27, %v28
  %v31 = vmul.f32 %v26, %v29
  %32 = vrot.lane.b32.xlu0 %v17, 16
  %v33 = vpop.permute.xlu0 %32
  %34 = vrot.lane.b32.xlu0 %v18, 16
  %v35 = vpop.permute.xlu0 %34
  %vm36 = vcmp.lt.s32.totalorder %v24, 16
  %v37 = vsel %vm36, %v33, %v35
  %v38 = vsel %vm36, %v35, %v33
  %s39 = scalar_lea.vmem %s1, 16
  %v40 = vld [vmem:[%s39] sm:$0xff]
  %v41 = vld [vmem:[%s39 + $0x8] sm:$0xff]
  %v42 = vmul.f32 %v38, %v40
  %v43 = vmul.f32 %v37, %v41
  %v44 = vadd.f32 %v30, %v42
  %v45 = vadd.f32 %v31, %v43
  %46 = vrot.lane.b32.xlu0 %v17, 15
  %v47 = vpop.permute.xlu0 %46
  %48 = vrot.lane.b32.xlu0 %v18, 15
  %v49 = vpop.permute.xlu0 %48
  %vm50 = vcmp.lt.s32.totalorder %v24, 15
  %v51 = vsel %vm50, %v47, %v49
  %v52 = vsel %vm50, %v49, %v47
  %s53 = scalar_lea.vmem %s1, 32
  %v54 = vld [vmem:[%s53] sm:$0xff]
  %v55 = vld [vmem:[%s53 + $0x8] sm:$0xff]
  %v56 = vmul.f32 %v52, %v54
  %v57 = vmul.f32 %v51, %v55
  %v58 = vadd.f32 %v44, %v56
  %v59 = vadd.f32 %v45, %v57
  %60 = vrot.lane.b32.xlu0 %v17, 1
  %v61 = vpop.permute.xlu0 %60
  %62 = vrot.lane.b32.xlu0 %v18, 1
  %v63 = vpop.permute.xlu0 %62
  %vm64 = vcmp.lt.s32.totalorder %v24, 1
  %v65 = vsel %vm64, %v61, %v63
  %v66 = vsel %vm64, %v63, %v61
  %s67 = scalar_lea.vmem %s1, 48
  %v68 = vld [vmem:[%s67] sm:$0xff]
  %v69 = vld [vmem:[%s67 + $0x8] sm:$0xff]
  %v70 = vmul.f32 %v66, %v68
  %v71 = vmul.f32 %v65, %v69
  %v72 = vadd.f32 %v58, %v70
  %v73 = vadd.f32 %v59, %v71
  %s74 = scalar_lea.vmem %s1, 64
  %v75 = vld [vmem:[%s74] sm:$0xff]
  %v76 = vld [vmem:[%s74 + $0x8] sm:$0xff]
  %v77 = vmul.f32 %v17, %v75
  %v78 = vmul.f32 %v18, %v76
  %v79 = vadd.f32 %v72, %v77
  %v80 = vadd.f32 %v73, %v78
  %81 = vrot.lane.b32.xlu0 %v17, 127
  %v82 = vpop.permute.xlu0 %81
  %83 = vrot.lane.b32.xlu0 %v18, 127
  %v84 = vpop.permute.xlu0 %83
  %vm85 = vcmp.lt.s32.totalorder %v24, 127
  %v86 = vsel %vm85, %v82, %v84
  %v87 = vsel %vm85, %v84, %v82
  %s88 = scalar_lea.vmem %s1, 80
  %v89 = vld [vmem:[%s88] sm:$0xff]
  %v90 = vld [vmem:[%s88 + $0x8] sm:$0xff]
  %v91 = vmul.f32 %v86, %v89
  %v92 = vmul.f32 %v87, %v90
  %v93 = vadd.f32 %v79, %v91
  %v94 = vadd.f32 %v80, %v92
  %95 = vrot.lane.b32.xlu0 %v17, 113
  %v96 = vpop.permute.xlu0 %95
  %97 = vrot.lane.b32.xlu0 %v18, 113
  %v98 = vpop.permute.xlu0 %97
  %vm99 = vcmp.lt.s32.totalorder %v24, 113
  %v100 = vsel %vm99, %v96, %v98
  %v101 = vsel %vm99, %v98, %v96
  %s102 = scalar_lea.vmem %s1, 96
  %v103 = vld [vmem:[%s102] sm:$0xff]
  %v104 = vld [vmem:[%s102 + $0x8] sm:$0xff]
  %v105 = vmul.f32 %v100, %v103
  %v106 = vmul.f32 %v101, %v104
  %v107 = vadd.f32 %v93, %v105
  %v108 = vadd.f32 %v94, %v106
  %109 = vrot.lane.b32.xlu0 %v17, 112
  %v110 = vpop.permute.xlu0 %109
  %111 = vrot.lane.b32.xlu0 %v18, 112
  %v112 = vpop.permute.xlu0 %111
  %vm113 = vcmp.lt.s32.totalorder %v24, 112
  %v114 = vsel %vm113, %v110, %v112
  %v115 = vsel %vm113, %v112, %v110
  %s116 = scalar_lea.vmem %s1, 112
  %v117 = vld [vmem:[%s116] sm:$0xff]
  %v118 = vld [vmem:[%s116 + $0x8] sm:$0xff]
  %v119 = vmul.f32 %v114, %v117
  %v120 = vmul.f32 %v115, %v118
  %v121 = vadd.f32 %v107, %v119
  %v122 = vadd.f32 %v108, %v120
  %123 = vrot.lane.b32.xlu0 %v17, 111
  %v124 = vpop.permute.xlu0 %123
  %125 = vrot.lane.b32.xlu0 %v18, 111
  %v126 = vpop.permute.xlu0 %125
  %vm127 = vcmp.lt.s32.totalorder %v24, 111
  %v128 = vsel %vm127, %v124, %v126
  %v129 = vsel %vm127, %v126, %v124
  %s130 = scalar_lea.vmem %s1, 128
  %v131 = vld [vmem:[%s130] sm:$0xff]
  %v132 = vld [vmem:[%s130 + $0x8] sm:$0xff]
  %v133 = vmul.f32 %v128, %v131
  %v134 = vmul.f32 %v129, %v132
  %v135 = vadd.f32 %v121, %v133
  %v136 = vadd.f32 %v122, %v134
  %v137 = vadd.f32 %v135, %v136
  %138 = vadd.xlane.f32.xlu0 %v137
  %v139 = vpop.xlane.xlu0 %138
  %v140 = vrot.slane %v139, 4
  %v141 = vadd.f32 %v139, %v140
  %v142 = vmul.f32 %v141, 0.001953125
  %144 = vset.pattern.permute.xlu0 0
  %145 = vperm.xlu0 %144, %v142
  %v146 = vpop.permute.xlu0 %145
  %v148 = vsub.f32 %v135, %v146
  %v149 = vsub.f32 %v136, %v146
  %v150 = vmul.f32 %v148, %v148
  %v151 = vmul.f32 %v149, %v149
  %v152 = vadd.f32 %v150, %v151
  %153 = vadd.xlane.f32.xlu0 %v152
  %v154 = vpop.xlane.xlu0 %153
  %v155 = vrot.slane %v154, 4
  %v156 = vadd.f32 %v154, %v155
  %v157 = vmul.f32 %v156, 0.001953125
  %v158 = vadd.f32 %v157, 1e-05
  %v159 = vrsqrt.pop %v158
  %v160 = vld [vmem:[%s2] sm:$0xff]
  %v161 = vmul.f32 %v160, %v159
  %163 = vset.pattern.permute.xlu0 0
  %164 = vperm.xlu0 %163, %v161
  %v165 = vpop.permute.xlu0 %164
  %v167 = vmul.f32 %v148, %v165
  %v168 = vmul.f32 %v149, %v165
  %v169 = vld [vmem:[%s3] sm:$0xff]
  %171 = vset.pattern.permute.xlu0 0
  %172 = vperm.xlu0 %171, %v169
  %v173 = vpop.permute.xlu0 %172
  %v175 = vadd.f32 %v167, %v173
  %v176 = vadd.f32 %v168, %v173
  %177 = vst [vmem:[%s4] sm:$0xff] %v175
  %178 = vst [vmem:[%s4 + $0x8] sm:$0xff] %v176
  // Predicated region
  $region18: #{_msfa_extract.1} parent=0 // pred_check
    _
  $region19: #{_msfa_extract.1} parent=0 // pred_check_branch
    %180 = sbr.rel (0) target = $region21
  $region20: #{_msfa_extract.1} parent=0 // pred_region
    _
  $region21: #{_msfa_extract.1} parent=0 // pred_fallthru
    _
  // Predicated region
  $region22: #{_msfa_extract.1} parent=0 // pred_check
    _
  $region23: #{_msfa_extract.1} parent=0 // pred_check_branch
    %182 = sbr.rel (0) target = $region25
  $region24: #{_msfa_extract.1} parent=0 // pred_region
    _
  $region25: #{_msfa_extract.1} parent=0 // pred_fallthru
    _

</llo_original>
